<compile_context>
chip_gen: v7x
topology: tpu7x:2x2x1
jax: 0.10.0
libtpu: 0.0.40
codegen_flags: <defaults>
</compile_context>

<pallas_src>
import jax
import jax.numpy as jnp
from jax import lax
from jax.experimental import pallas as pl
from jax.experimental.pallas import tpu as pltpu

_LANE = 128
_SUBLANE = 8


def _round_up(v, m):
    return ((v + m - 1) // m) * m


def _round_down(v, m):
    return (v // m) * m


def _accumulate(x_ref, rm, rs, n_full, rem):
    """Fold 128-lane chunks of the current tile into (running max, running sum)."""
    # Unmasked hot loop over fully-valid chunks (static 128-aligned offsets).
    for k in range(n_full):
        c = x_ref[:, pl.ds(k * _LANE, _LANE)].astype(jnp.float32)
        rm = jnp.maximum(rm, c)
        rs = rs + c
    if rem > 0:
        # Masked tail chunk: only the first `rem` lanes hold valid data.
        c = x_ref[:, pl.ds(n_full * _LANE, _LANE)].astype(jnp.float32)
        lane = lax.broadcasted_iota(jnp.int32, c.shape, 1)
        valid = lane < rem
        rm = jnp.maximum(rm, jnp.where(valid, c, -jnp.inf))
        rs = rs + jnp.where(valid, c, 0.0)
    return rm, rs


def _make_kernel(*, tm, ts, s_total, n_steps):
    n_full = ts // _LANE                       # chunks in an interior step
    tail = s_total - (n_steps - 1) * ts        # valid columns in the last step
    tail_full = tail // _LANE
    tail_rem = tail % _LANE
    uniform = tail == ts                       # no masking needed anywhere

    def kernel(x_ref, max_ref, sum_ref):
        if n_steps == 1:
            # Single spatial step: accumulate straight into fresh registers.
            rm = jnp.full((tm, _LANE), -jnp.inf, dtype=jnp.float32)
            rs = jnp.zeros((tm, _LANE), dtype=jnp.float32)
            rm, rs = _accumulate(x_ref, rm, rs, tail_full, tail_rem)
            max_ref[...] = rm
            sum_ref[...] = rs
            return

        j = pl.program_id(1)

        # Outputs double as resident VMEM accumulators across the spatial axis.
        @pl.when(j == 0)
        def _init():
            max_ref[...] = jnp.full_like(max_ref, -jnp.inf)
            sum_ref[...] = jnp.zeros_like(sum_ref)

        def step(n_full_step, rem_step):
            rm, rs = _accumulate(x_ref, max_ref[...], sum_ref[...],
                                 n_full_step, rem_step)
            max_ref[...] = rm
            sum_ref[...] = rs

        if uniform:
            step(n_full, 0)
        else:
            @pl.when(j < n_steps - 1)
            def _interior():
                step(n_full, 0)              # unmasked hot path

            @pl.when(j == n_steps - 1)
            def _last():
                step(tail_full, tail_rem)    # masking only here

    return kernel


def adaptive_concat_pool3d(x, *, tm_max=64, ts_max=8192,
                           per_buffer_bytes=4 * 1024 * 1024,
                           vmem_limit_bytes=None):
    """x: (N, C, D, H, W) -> (N, 2*C, 1, 1, 1) = concat([max, mean], axis=1)."""
    n, c, d, h, w = x.shape
    r = n * c
    s = d * h * w
    itemsize = jnp.dtype(x.dtype).itemsize
    x2 = x.reshape(r, s)

    # ---- Row tile: aligned to the dtype's sublane packing (8/16/32 rows for
    # 32/16/8-bit); prefer >= 2 row blocks so both v7x TensorCores get work
    # (only a couple of extra grid steps on single-TC v5e/v6e). ----
    packing = max(1, 4 // itemsize)
    row_align = _SUBLANE * packing
    if r <= row_align:
        tm = r                                   # single full-extent row block
    else:
        tm = min(max(tm_max, row_align), _round_down(r, row_align))
        tm = _round_down(tm, row_align)
        if tm >= r and r >= 2 * row_align:
            tm = max(row_align, _round_down(-(-r // 2), row_align))

    # ---- Spatial tile: multiple of 128, capped by ts_max and a per-buffer
    # VMEM budget that stays safe on v7x's smaller (64 MiB) VMEM. ----
    ts_budget = per_buffer_bytes // max(1, tm * itemsize)
    ts_cap = max(_LANE, _round_down(min(ts_max, ts_budget), _LANE))
    ts = min(ts_cap, _round_up(s, _LANE))
    n_steps = pl.cdiv(s, ts)

    grid = (pl.cdiv(r, tm), n_steps)
    kernel = _make_kernel(tm=tm, ts=ts, s_total=s, n_steps=n_steps)

    # ---- VMEM limit derived from actual usage (double-buffered input tile +
    # the two lane-dense f32 partial outputs) plus slack. ----
    if vmem_limit_bytes is None:
        in_bytes = 2 * tm * ts * itemsize          # double-buffered input tile
        out_bytes = 2 * 2 * tm * _LANE * 4         # two f32 outputs, 2 buffers
        vmem_limit_bytes = min(max(in_bytes + out_bytes + (4 << 20), 8 << 20),
                               32 << 20)

    cost = pl.CostEstimate(
        flops=2 * r * s,                           # one max + one add per elem
        transcendentals=0,
        bytes_accessed=r * s * itemsize + 2 * r * _LANE * 4,
    )

    mx_part, sum_part = pl.pallas_call(
        kernel,
        out_shape=(jax.ShapeDtypeStruct((r, _LANE), jnp.float32),
                   jax.ShapeDtypeStruct((r, _LANE), jnp.float32)),
        grid_spec=pltpu.PrefetchScalarGridSpec(
            num_scalar_prefetch=0,
            grid=grid,
            in_specs=[pl.BlockSpec((tm, ts), lambda i, j: (i, j))],
            out_specs=[pl.BlockSpec((tm, _LANE), lambda i, j: (i, 0)),
                       pl.BlockSpec((tm, _LANE), lambda i, j: (i, 0))],
        ),
        compiler_params=pltpu.CompilerParams(
            dimension_semantics=("parallel", "arbitrary"),
            vmem_limit_bytes=int(vmem_limit_bytes),
        ),
        cost_estimate=cost,
    )(x2)

    # Tiny finalize on the (R, 128) partials: cross-lane reduce, 1/S, concat.
    mx = jnp.max(mx_part, axis=-1).astype(x.dtype).reshape(n, c)
    av = (jnp.sum(sum_part, axis=-1) * (1.0 / float(s))).astype(x.dtype).reshape(n, c)
    out = jnp.concatenate([mx, av], axis=1)
    return out.reshape(n, 2 * c, 1, 1, 1)


def _reference(x):
    mx = jnp.max(x, axis=(2, 3, 4), keepdims=True)
    av = jnp.mean(x, axis=(2, 3, 4), keepdims=True)
    return jnp.concatenate([mx, av], axis=1)


def _check(out, ref, tag, atol=1e-5, rtol=1e-5):
    assert out.shape == ref.shape, (tag, out.shape, ref.shape)
    ok = jnp.allclose(out.astype(jnp.float32), ref.astype(jnp.float32),
                      atol=atol, rtol=rtol)
    assert ok, f"mismatch vs reference: {tag}"


if __name__ == "__main__":
    key = jax.random.PRNGKey(0)
    k1, k2, k3, k4 = jax.random.split(key, 4)

    # Primary small NCDHW input (single spatial grid step, uniform chunks).
    N, C, D, H, W = 2, 4, 8, 8, 8
    x = jax.random.normal(k1, (N, C, D, H, W), dtype=jnp.float32)
    out = jax.block_until_ready(adaptive_concat_pool3d(x))
    _check(out, _reference(x), "default-tiles")

    # Tiny spatial tile -> multi-step grid reduction (output-resident accs).
    out_b = jax.block_until_ready(adaptive_concat_pool3d(x, ts_max=128))
    _check(out_b, _reference(x), "tiled-reduction")

    # Odd spatial size (S = 245): single step, masked tail chunk.
    x_c = jax.random.normal(k2, (2, 3, 5, 7, 7), dtype=jnp.float32)
    out_c = jax.block_until_ready(adaptive_concat_pool3d(x_c))
    _check(out_c, _reference(x_c), "odd-spatial")

    # Odd spatial + small tile -> unmasked interior steps + masked last step.
    # All-negative data so any unmasked out-of-bounds garbage corrupts the max.
    x_d = jax.random.normal(k3, (2, 3, 7, 7, 7), dtype=jnp.float32) - 10.0
    out_d = jax.block_until_ready(adaptive_concat_pool3d(x_d, ts_max=128))
    _check(out_d, _reference(x_d), "masked-tail")

    # bf16 input: packed row alignment (16) and >= 2 row blocks (r=32 -> tm=16).
    x_e = jax.random.normal(k4, (2, 16, 10, 10, 10), dtype=jnp.bfloat16)
    out_e = jax.block_until_ready(adaptive_concat_pool3d(x_e))
    _check(out_e, _reference(x_e), "bf16", atol=1e-2, rtol=1e-2)

    print("KERNEL_OK")
</pallas_src>

<mosaic_0001>
module attributes {stable_mosaic.version = 11 : i64} {
  func.func @kernel(%arg0: i32, %arg1: i32, %arg2: memref<8x512xf32, #tpu.memory_space<vmem>>, %arg3: memref<8x128xf32, #tpu.memory_space<vmem>>, %arg4: memref<8x128xf32, #tpu.memory_space<vmem>>) attributes {dimension_semantics = [#tpu.dimension_semantics<parallel>, #tpu.dimension_semantics<arbitrary>], iteration_bounds = array<i64: 1, 1>, scalar_prefetch = 0 : i64, scratch_operands = 0 : i64, tpu.core_type = #tpu.core_type<tc>, window_params = [{transform_indices = @transform_0, window_bounds = array<i64: 8, 512>}, {transform_indices = @transform_1, window_bounds = array<i64: 8, 128>}, {transform_indices = @transform_2, window_bounds = array<i64: 8, 128>}]} {
    %cst = arith.constant 0xFF800000 : f32
    %0 = vector.broadcast %cst : f32 to vector<8x128xf32>
    %cst_0 = arith.constant 0.000000e+00 : f32
    %1 = vector.broadcast %cst_0 : f32 to vector<8x128xf32>
    %c0 = arith.constant 0 : index
    %c0_1 = arith.constant 0 : index
    %2 = vector.load %arg2[%c0, %c0_1] : memref<8x512xf32, #tpu.memory_space<vmem>>, vector<8x128xf32>
    %3 = arith.maximumf %0, %2 : vector<8x128xf32>
    %4 = arith.addf %1, %2 : vector<8x128xf32>
    %c0_2 = arith.constant 0 : index
    %c128 = arith.constant 128 : index
    %5 = vector.load %arg2[%c0_2, %c128] : memref<8x512xf32, #tpu.memory_space<vmem>>, vector<8x128xf32>
    %6 = arith.maximumf %3, %5 : vector<8x128xf32>
    %7 = arith.addf %4, %5 : vector<8x128xf32>
    %c0_3 = arith.constant 0 : index
    %c256 = arith.constant 256 : index
    %8 = vector.load %arg2[%c0_3, %c256] : memref<8x512xf32, #tpu.memory_space<vmem>>, vector<8x128xf32>
    %9 = arith.maximumf %6, %8 : vector<8x128xf32>
    %10 = arith.addf %7, %8 : vector<8x128xf32>
    %c0_4 = arith.constant 0 : index
    %c384 = arith.constant 384 : index
    %11 = vector.load %arg2[%c0_4, %c384] : memref<8x512xf32, #tpu.memory_space<vmem>>, vector<8x128xf32>
    %12 = arith.maximumf %9, %11 : vector<8x128xf32>
    %13 = arith.addf %10, %11 : vector<8x128xf32>
    %c0_5 = arith.constant 0 : index
    %c0_6 = arith.constant 0 : index
    %14 = vector.load %arg3[%c0_5, %c0_6] : memref<8x128xf32, #tpu.memory_space<vmem>>, vector<8x128xf32>
    tpu.vector_store %arg3[%c0_5, %c0_6], %12 {strides = array<i32>} : memref<8x128xf32, #tpu.memory_space<vmem>>, vector<8x128xf32>,
    %c0_7 = arith.constant 0 : index
    %c0_8 = arith.constant 0 : index
    %15 = vector.load %arg4[%c0_7, %c0_8] : memref<8x128xf32, #tpu.memory_space<vmem>>, vector<8x128xf32>
    tpu.vector_store %arg4[%c0_7, %c0_8], %13 {strides = array<i32>} : memref<8x128xf32, #tpu.memory_space<vmem>>, vector<8x128xf32>,
    return
  }
  func.func @transform_0(%arg0: i32, %arg1: i32) -> (i32, i32) {
    %c0_i32 = arith.constant 0 : i32
    return %arg0, %arg1 : i32, i32
  }
  func.func @transform_1(%arg0: i32, %arg1: i32) -> (i32, i32) {
    %c0_i32 = arith.constant 0 : i32
    %c0_i32_0 = arith.constant 0 : i32
    return %arg0, %c0_i32 : i32, i32
  }
  func.func @transform_2(%arg0: i32, %arg1: i32) -> (i32, i32) {
    %c0_i32 = arith.constant 0 : i32
    %c0_i32_0 = arith.constant 0 : i32
    return %arg0, %c0_i32 : i32, i32
  }
}

</mosaic_0001>

<llo_original>
// kernel: tpu_custom_call.1
$region0: #{tpu_custom_call.1}
  #allocation0 [shape = 'u32[]', space=smem, size = 0x4, offset = 0x4, fixed_abs, tag = 'smem constant byte address 0x4 - core index']
  #allocation1 [shape = 'u32[144,128]{1,0:T(1,128)}', space=vmem, size = 0x12000, scoped, tag = 'internal scratch']
  %s0 = inlined_call_operand.hbm [shape: f32[8,512], index: 0, kind: input, shape index: {}]
  %s1 = inlined_call_operand.hbm [shape: f32[8,128], index: 1, kind: output, shape index: {0}]
  %s2 = inlined_call_operand.hbm [shape: f32[8,128], index: 2, kind: output, shape index: {1}]
  %3 = xla_tuple %s1, %s2
  %s4 = sld [smem:[#allocation0]]
  $region26: #{tpu_custom_call.1} parent=0
    _
  %s6 = ssub.s32 1, %s4
  %s7 = scalar_select 0, %s6, %s4
  $region1: #{tpu_custom_call.1} parent=0
    #allocation2 [shape = 'u8[16384]{0}', space=vmem, size = 0x4000, scoped, tag = 'input window, operand 0, single buffered']
    #allocation3 [shape = 's32[1]{0}', space=sflag, size = 0x4, scoped, tag = 'scoped memory for tpu_custom_call.1']
    #allocation4 [shape = 's32[1]{0}', space=sflag, size = 0x4, scoped, tag = 'scoped memory for tpu_custom_call.1']
    #allocation5 [shape = 'u8[4096]{0}', space=vmem, size = 0x1000, scoped, tag = 'output window, operand 0, single buffered']
    #allocation6 [shape = 'u8[4096]{0}', space=vmem, size = 0x1000, scoped, tag = 'output window, operand 1, single buffered']
    #allocation7 [shape = 's32[1]{0}', space=sflag, size = 0x4, scoped, tag = 'scoped memory for tpu_custom_call.1']
    %8 = vsyncpa [#allocation3], 0
    %9 = vsyncpa [#allocation4], 0
    %10 = vsyncpa [#allocation7], 0
    // Predicated region
    $region2: #{tpu_custom_call.1} parent=1 // pred_check
      _
    $region3: #{tpu_custom_call.1} parent=1 // pred_check_branch
      %12 = sbr.rel (0) target = $region5
    $region4: #{tpu_custom_call.1} parent=1 // pred_region
      %s14 = ssub.s32 512, 512
      %15 = vsyncadd [#allocation3], %s14
      %s17 = sshll.u32 [#allocation2], 4
      %s18 = int_to_ptr.vmem [resolvable:$true] %s17
      %20 = dma.hbm_to_vmem [thread:$0]  %s0, 512, %s18, [#allocation3]
    $region5: #{tpu_custom_call.1} parent=1 // pred_fallthru
      _
    // Predicated region
    $region6: #{tpu_custom_call.1} parent=1 // pred_check
      _
    $region7: #{tpu_custom_call.1} parent=1 // pred_check_branch
      %22 = sbr.rel (0) target = $region9
    $region8: #{tpu_custom_call.1} parent=1 // pred_region
      %23 = dma.done [#allocation3], 512
    $region9: #{tpu_custom_call.1} parent=1 // pred_fallthru
      _
    %v24 = vld [vmem:[#allocation2] sm:$0xff]
    %v25 = vadd.f32 %v24, 0.0
    %v26 = vld [vmem:[#allocation2 + $0x8] sm:$0xff]
    %v27 = vmax.f32 %v24, %v26
    %v28 = vadd.f32 %v25, %v26
    %v29 = vld [vmem:[#allocation2 + $0x10] sm:$0xff]
    %v30 = vmax.f32 %v27, %v29
    %v31 = vadd.f32 %v28, %v29
    %v32 = vld [vmem:[#allocation2 + $0x18] sm:$0xff]
    %v33 = vmax.f32 %v30, %v32
    %v34 = vadd.f32 %v31, %v32
    %35 = vst [vmem:[#allocation5] sm:$0xff] %v33
    %36 = vst [vmem:[#allocation6] sm:$0xff] %v34
    // Predicated region
    $region10: #{tpu_custom_call.1} parent=1 // pred_check
      _
    $region11: #{tpu_custom_call.1} parent=1 // pred_check_branch
      %38 = sbr.rel (0) target = $region13
    $region12: #{tpu_custom_call.1} parent=1 // pred_region
      %s40 = ssub.s32 128, 128
      %41 = vsyncadd [#allocation4], %s40
      %s43 = sshll.u32 [#allocation5], 4
      %s44 = int_to_ptr.vmem [resolvable:$true] %s43
      %46 = dma.vmem_to_hbm [thread:$0]  %s44, 128, %s1, [#allocation4]
    $region13: #{tpu_custom_call.1} parent=1 // pred_fallthru
      _
    // Predicated region
    $region14: #{tpu_custom_call.1} parent=1 // pred_check
      _
    $region15: #{tpu_custom_call.1} parent=1 // pred_check_branch
      %48 = sbr.rel (0) target = $region17
    $region16: #{tpu_custom_call.1} parent=1 // pred_region
      %s50 = ssub.s32 128, 128
      %51 = vsyncadd [#allocation7], %s50
      %s53 = sshll.u32 [#allocation6], 4
      %s54 = int_to_ptr.vmem [resolvable:$true] %s53
      %56 = dma.vmem_to_hbm [thread:$0]  %s54, 128, %s2, [#allocation7]
    $region17: #{tpu_custom_call.1} parent=1 // pred_fallthru
      _
    // Predicated region
    $region18: #{tpu_custom_call.1} parent=1 // pred_check
      _
    $region19: #{tpu_custom_call.1} parent=1 // pred_check_branch
      %58 = sbr.rel (0) target = $region21
    $region20: #{tpu_custom_call.1} parent=1 // pred_region
      %59 = dma.done [#allocation4], 128
    $region21: #{tpu_custom_call.1} parent=1 // pred_fallthru
      _
    // Predicated region
    $region22: #{tpu_custom_call.1} parent=1 // pred_check
      _
    $region23: #{tpu_custom_call.1} parent=1 // pred_check_branch
      %61 = sbr.rel (0) target = $region25
    $region24: #{tpu_custom_call.1} parent=1 // pred_region
      %62 = dma.done [#allocation7], 128
    $region25: #{tpu_custom_call.1} parent=1 // pred_fallthru
      _
    %63 = vsyncpa [#allocation3], 1
    %64 = vsyncpa [#allocation4], 1
    %65 = vsyncpa [#allocation7], 1

</llo_original>
